<compile_context>
chip_gen: v7x
topology: tpu7x:2x2x1
jax: 0.10.0
libtpu: 0.0.40
codegen_flags: <defaults>
</compile_context>

<pallas_src>
import math

import jax
import jax.numpy as jnp
from jax.experimental import pallas as pl
from jax.experimental.pallas import tpu as pltpu

_LANE = 128
_SUBLANE = 8
# If everything (x, w, bias, out) fits under this budget, use the no-grid path.
_VMEM_BUDGET_BYTES = 8 * 1024 * 1024


def _round_up(n, m):
    return ((n + m - 1) // m) * m


# ----------------------------- kernel bodies -----------------------------

def _linear_bias_kernel(x_ref, w_ref, b_ref, o_ref):
    # MXU matmul with f32 accumulation + f32 bias add on lane-dense tiles.
    acc = jnp.dot(x_ref[...], w_ref[...], preferred_element_type=jnp.float32)
    o_ref[...] = (acc + b_ref[...]).astype(o_ref.dtype)


def _linear_nobias_kernel(x_ref, w_ref, o_ref):
    o_ref[...] = jnp.dot(
        x_ref[...], w_ref[...], preferred_element_type=jnp.float32
    ).astype(o_ref.dtype)


def _cost(B, Fin, Fout, in_itemsize, has_bias):
    bytes_accessed = (B * Fin + Fin * Fout) * in_itemsize + B * Fout * 4
    if has_bias:
        bytes_accessed += Fout * 4
    return pl.CostEstimate(
        flops=2 * B * Fin * Fout, transcendentals=0,
        bytes_accessed=bytes_accessed)


# ------------------------- no-grid (small) path ---------------------------

def _linear_single_block(x, w_t, b):
    """Whole problem VMEM-resident; kernel body runs exactly once."""
    B_p, Fin = x.shape
    Fout_p = w_t.shape[1]

    vmem = pl.BlockSpec(memory_space=pltpu.MemorySpace.VMEM)
    out_shape = jax.ShapeDtypeStruct((B_p, Fout_p), jnp.float32)
    cost = _cost(B_p, Fin, Fout_p, x.dtype.itemsize, b is not None)

    if b is not None:
        return pl.pallas_call(
            _linear_bias_kernel,
            out_shape=out_shape,
            in_specs=[vmem, vmem, vmem],
            out_specs=vmem,
            cost_estimate=cost,
        )(x, w_t, b)
    return pl.pallas_call(
        _linear_nobias_kernel,
        out_shape=out_shape,
        in_specs=[vmem, vmem],
        out_specs=vmem,
        cost_estimate=cost,
    )(x, w_t)


# ------------------------- tiled (large) path -----------------------------

def _linear_tiled(x, w_t, b, tm_pref=256, tn_pref=512):
    """2-D (M, N) grid, K resident per block; both axes 'parallel' (megacore).

    Fout_p is a multiple of 128 by construction, so tn is lane-aligned; the
    wrapper pads M and N up to tile multiples and the caller slices back.
    """
    # TODO(synk): add a K (in_features) reduction axis + f32 accumulator if a
    # head's in_features grows beyond what fits per-block in VMEM.
    B, Fin = x.shape
    Fout_p = w_t.shape[1]

    tm = min(tm_pref, _round_up(B, _SUBLANE))
    tn = min(tn_pref, Fout_p)            # Fout_p % 128 == 0  ->  tn % 128 == 0
    B_p = _round_up(B, tm)
    N_p = _round_up(Fout_p, tn)

    if B_p != B:
        x = jnp.pad(x, ((0, B_p - B), (0, 0)))
    if N_p != Fout_p:
        w_t = jnp.pad(w_t, ((0, 0), (0, N_p - Fout_p)))
        if b is not None:
            b = jnp.pad(b, ((0, 0), (0, N_p - Fout_p)))

    grid = (B_p // tm, N_p // tn)
    cost = _cost(B_p, Fin, N_p, x.dtype.itemsize, b is not None)
    cparams = pltpu.CompilerParams(
        dimension_semantics=("parallel", "parallel"))
    out_shape = jax.ShapeDtypeStruct((B_p, N_p), jnp.float32)

    x_spec = pl.BlockSpec((tm, Fin), lambda i, j: (i, 0))
    w_spec = pl.BlockSpec((Fin, tn), lambda i, j: (0, j))
    o_spec = pl.BlockSpec((tm, tn), lambda i, j: (i, j))

    if b is not None:
        b_spec = pl.BlockSpec((1, tn), lambda i, j: (0, j))
        return pl.pallas_call(
            _linear_bias_kernel,
            out_shape=out_shape,
            grid=grid,
            in_specs=[x_spec, w_spec, b_spec],
            out_specs=o_spec,
            compiler_params=cparams,
            cost_estimate=cost,
        )(x, w_t, b)
    return pl.pallas_call(
        _linear_nobias_kernel,
        out_shape=out_shape,
        grid=grid,
        in_specs=[x_spec, w_spec],
        out_specs=o_spec,
        compiler_params=cparams,
        cost_estimate=cost,
    )(x, w_t)


# ------------------------------ dispatcher --------------------------------

@jax.jit
def _linear_pallas(x, w_t, b):
    """y_padded = x @ w_t (+ b).

    w_t is (Fin, Fout_p) with Fout_p a multiple of 128 (lane-dense output);
    b is (1, Fout_p) f32 or None.  Picks no-grid vs. tiled path from static
    shapes.  Returns a row/col-padded result; callers slice back.
    """
    B, Fin = x.shape
    Fout_p = w_t.shape[1]

    # Match the stored weight compute dtype (no-op when both are f32).
    x = x.astype(w_t.dtype)

    # Sublane-align the batch (static decision; no-op for aligned batches).
    B_p = _round_up(B, _SUBLANE)
    if B_p != B:
        x = jnp.pad(x, ((0, B_p - B), (0, 0)))

    itemsize = x.dtype.itemsize
    total = ((B_p * Fin + Fin * Fout_p) * itemsize + B_p * Fout_p * 4
             + (Fout_p * 4 if b is not None else 0))
    if total <= _VMEM_BUDGET_BYTES:
        return _linear_single_block(x, w_t, b)
    return _linear_tiled(x, w_t, b)


# ------------------------------ module port -------------------------------

class MultiTaskClassifierPallas:
    """JAX/Pallas port of MultiTaskClassifier (ModuleDict of Linear heads).

    Head selection by task_label is a static Python dict lookup (same as
    PyTorch ModuleDict).  Weights are stored pre-transposed (Fin, Fout) and
    zero-padded along Fout to a multiple of 128 so the kernel output is
    lane-dense; the wrapper slices back to the true class count.
    """

    def __init__(self, in_features, initial_out_features, bias=True, key=None,
                 compute_dtype=jnp.float32):
        self.in_features = in_features
        self.bias = bias
        self.compute_dtype = compute_dtype
        self._key = key if key is not None else jax.random.PRNGKey(0)
        # task_label -> (w_t_padded, b_padded_or_None, true_out_features)
        self.classifiers = {}
        self._fused_cache = None
        self._add_head(initial_out_features, 0)

    def _next_keys(self, n):
        self._key, *ks = jax.random.split(self._key, n + 1)
        return ks

    def _add_head(self, out_features, task_label):
        # Deterministic init mimicking nn.Linear: U(-1/sqrt(in), 1/sqrt(in)).
        kw, kb = self._next_keys(2)
        bound = 1.0 / math.sqrt(self.in_features)
        fout_p = max(_LANE, _round_up(out_features, _LANE))

        w = jax.random.uniform(
            kw, (self.in_features, out_features), jnp.float32, -bound, bound)
        w_p = jnp.zeros((self.in_features, fout_p), jnp.float32)
        w_p = w_p.at[:, :out_features].set(w).astype(self.compute_dtype)

        if self.bias:
            bvec = jax.random.uniform(
                kb, (1, out_features), jnp.float32, -bound, bound)
            b_p = jnp.zeros((1, fout_p), jnp.float32)
            b_p = b_p.at[:, :out_features].set(bvec)
        else:
            b_p = None  # bias-free kernel variant: no zeros array shipped

        self.classifiers[str(task_label)] = (w_p, b_p, out_features)
        self._fused_cache = None  # invalidate fused weights

    def adaptation(self, num_class, task_label):
        if str(task_label) not in self.classifiers:
            self._add_head(num_class, task_label)

    def __call__(self, x, task_label: int):
        w_p, b_p, fout = self.classifiers[str(task_label)]
        y = _linear_pallas(x, w_p, b_p)
        return y[: x.shape[0], :fout]

    # ---- fused multi-head evaluation: one pallas_call for all heads ----
    def _fused_params(self):
        if self._fused_cache is None:
            ws, bs, layout, off = [], [], {}, 0
            for k, (w_p, b_p, fout) in self.classifiers.items():
                ws.append(w_p)
                if self.bias:
                    bs.append(b_p)
                layout[k] = (off, fout)
                off += w_p.shape[1]
            w_cat = jnp.concatenate(ws, axis=1)
            b_cat = jnp.concatenate(bs, axis=1) if self.bias else None
            self._fused_cache = (w_cat, b_cat, layout)
        return self._fused_cache

    def forward_all_tasks(self, x):
        """Evaluate every head with a single fused matmul; returns a dict."""
        w_cat, b_cat, layout = self._fused_params()
        y = _linear_pallas(x, w_cat, b_cat)
        B = x.shape[0]
        return {k: y[:B, off:off + fout] for k, (off, fout) in layout.items()}


if __name__ == "__main__":
    key = jax.random.PRNGKey(0)
    kx, kp0, kp1, kp2, kw, kb2, kx2 = jax.random.split(key, 7)

    batch = 8
    in_features = 32
    initial_out_features = 16

    x = jax.random.normal(kx, (batch, in_features), jnp.float32)

    # ---- f32 model (exact parity with PyTorch semantics) ----
    model = MultiTaskClassifierPallas(in_features, initial_out_features,
                                      bias=True, key=kp0)
    model.adaptation(num_class=10, task_label=1)

    y0 = model(x, task_label=0)
    y1 = model(x, task_label=1)
    jax.block_until_ready((y0, y1))
    assert y0.shape == (batch, initial_out_features)
    assert y1.shape == (batch, 10)

    w0, b0, f0 = model.classifiers["0"]
    w1, b1, f1 = model.classifiers["1"]
    ref0 = x @ w0[:, :f0] + b0[:, :f0]
    ref1 = x @ w1[:, :f1] + b1[:, :f1]
    assert jnp.allclose(y0, ref0, atol=1e-5, rtol=1e-5)
    assert jnp.allclose(y1, ref1, atol=1e-5, rtol=1e-5)

    # ---- fused multi-head eval: single pallas_call serving all heads ----
    ys = model.forward_all_tasks(x)
    jax.block_until_ready(ys)
    assert jnp.allclose(ys["0"], ref0, atol=1e-5, rtol=1e-5)
    assert jnp.allclose(ys["1"], ref1, atol=1e-5, rtol=1e-5)

    # ---- bf16 compute mode (v6e/v7x MXU): looser tolerance, documented ----
    model_bf16 = MultiTaskClassifierPallas(in_features, initial_out_features,
                                           bias=True, key=kp1,
                                           compute_dtype=jnp.bfloat16)
    yb = model_bf16(x, task_label=0)
    jax.block_until_ready(yb)
    wb, bb, fb = model_bf16.classifiers["0"]
    refb = (x.astype(jnp.float32) @ wb[:, :fb].astype(jnp.float32)
            + bb[:, :fb])
    assert jnp.allclose(yb, refb, atol=1e-1, rtol=2e-2)

    # ---- bias=False path (no zero-bias array, bias-free kernel) ----
    model_nb = MultiTaskClassifierPallas(in_features, initial_out_features,
                                         bias=False, key=kp2)
    yn = model_nb(x, task_label=0)
    jax.block_until_ready(yn)
    wn, _, fn = model_nb.classifiers["0"]
    assert jnp.allclose(yn, x @ wn[:, :fn], atol=1e-5, rtol=1e-5)

    # ---- tiled (gridded) path, exercised directly at modest shapes ----
    Bt, Ft = 300, 600                         # -> Fout_p = 640, grid (2, 2)
    fout_pt = _round_up(Ft, _LANE)
    wt = jax.random.normal(kw, (in_features, Ft), jnp.float32) * 0.05
    wt_p = jnp.zeros((in_features, fout_pt), jnp.float32).at[:, :Ft].set(wt)
    bt_p = jnp.zeros((1, fout_pt), jnp.float32).at[:, :Ft].set(
        jax.random.normal(kb2, (1, Ft), jnp.float32) * 0.05)
    xt = jax.random.normal(kx2, (Bt, in_features), jnp.float32)
    yt = jax.jit(_linear_tiled)(xt, wt_p, bt_p)
    jax.block_until_ready(yt)
    ref_t = xt @ wt_p[:, :Ft] + bt_p[:, :Ft]
    assert jnp.allclose(yt[:Bt, :Ft], ref_t, atol=1e-4, rtol=1e-4)

    print("KERNEL_OK")
</pallas_src>

<mosaic_0001>
module attributes {stable_mosaic.version = 11 : i64} {
  func.func @_linear_bias_kernel(%arg0: memref<8x32xf32, #tpu.memory_space<vmem>>, %arg1: memref<32x128xf32, #tpu.memory_space<vmem>>, %arg2: memref<1x128xf32, #tpu.memory_space<vmem>>, %arg3: memref<8x128xf32, #tpu.memory_space<vmem>>) attributes {dimension_semantics = [], scalar_prefetch = 0 : i64, scratch_operands = 0 : i64, tpu.core_type = #tpu.core_type<tc>} {
    %c0 = arith.constant 0 : index
    %c0_0 = arith.constant 0 : index
    %0 = vector.load %arg0[%c0, %c0_0] : memref<8x32xf32, #tpu.memory_space<vmem>>, vector<8x32xf32>
    %c0_1 = arith.constant 0 : index
    %c0_2 = arith.constant 0 : index
    %1 = vector.load %arg1[%c0_1, %c0_2] : memref<32x128xf32, #tpu.memory_space<vmem>>, vector<32x128xf32>
    %cst = arith.constant dense<0.000000e+00> : vector<8x128xf32>
    %2 = tpu.matmul %0, %1, %cst {dimension_numbers = #tpu.dot_dimension_numbers<[1], [0], [0], [1], [0, 0, 1, 1], [], []>} : vector<8x32xf32>, vector<32x128xf32>, vector<8x128xf32> -> vector<8x128xf32>
    %c0_3 = arith.constant 0 : index
    %c0_4 = arith.constant 0 : index
    %3 = vector.load %arg2[%c0_3, %c0_4] : memref<1x128xf32, #tpu.memory_space<vmem>>, vector<1x128xf32>
    %4 = vector.broadcast %3 : vector<1x128xf32> to vector<8x128xf32>
    %5 = arith.addf %2, %4 : vector<8x128xf32>
    %c0_5 = arith.constant 0 : index
    %c0_6 = arith.constant 0 : index
    %6 = vector.load %arg3[%c0_5, %c0_6] : memref<8x128xf32, #tpu.memory_space<vmem>>, vector<8x128xf32>
    tpu.vector_store %arg3[%c0_5, %c0_6], %5 {strides = array<i32>} : memref<8x128xf32, #tpu.memory_space<vmem>>, vector<8x128xf32>,
    return
  }
}

</mosaic_0001>

<llo_original>
// kernel: _linear_pallas.1
$region0: #{_linear_pallas.1}
  #allocation0 [shape = 'u32[]', space=smem, size = 0x4, offset = 0x4, fixed_abs, tag = 'smem constant byte address 0x4 - core index']
  #allocation1 [shape = 'u32[144,128]{1,0:T(1,128)}', space=vmem, size = 0x12000, scoped, tag = 'internal scratch']
  %s0 = inlined_call_operand.hbm [shape: f32[8,32], index: 0, kind: input, shape index: {}]
  %s1 = inlined_call_operand.hbm [shape: f32[32,128], index: 1, kind: input, shape index: {}]
  %s2 = inlined_call_operand.vmem [shape: f32[1,128], index: 2, kind: input, shape index: {}]
  %s3 = inlined_call_operand.hbm [shape: f32[8,128], index: 3, kind: output, shape index: {}]
  %s4 = sld [smem:[#allocation0]]
  $region30: #{_linear_pallas.1} parent=0
    _
  %s6 = ssub.s32 1, %s4
  %s7 = scalar_select 0, %s6, %s4
  $region1: #{_linear_pallas.1} parent=0
    #allocation2 [shape = 'u8[4096]{0}', space=vmem, size = 0x1000, scoped, tag = 'input window, operand 0, single buffered']
    #allocation3 [shape = 's32[1]{0}', space=sflag, size = 0x4, scoped, tag = 'scoped memory for _linear_pallas.1']
    #allocation4 [shape = 's32[1]{0}', space=sflag, size = 0x4, scoped, tag = 'scoped memory for _linear_pallas.1']
    #allocation5 [shape = 'u8[16384]{0}', space=vmem, size = 0x4000, scoped, tag = 'input window, operand 1, single buffered']
    #allocation6 [shape = 's32[1]{0}', space=sflag, size = 0x4, scoped, tag = 'scoped memory for _linear_pallas.1']
    #allocation7 [shape = 'u8[4096]{0}', space=vmem, size = 0x1000, scoped, tag = 'output window, operand 0, single buffered']
    %8 = vsyncpa [#allocation3], 0
    %9 = vsyncpa [#allocation6], 0
    %10 = vsyncpa [#allocation4], 0
    // Predicated region
    $region2: #{_linear_pallas.1} parent=1 // pred_check
      _
    $region3: #{_linear_pallas.1} parent=1 // pred_check_branch
      %12 = sbr.rel (0) target = $region5
    $region4: #{_linear_pallas.1} parent=1 // pred_region
      %s14 = ssub.s32 128, 128
      %15 = vsyncadd [#allocation3], %s14
      %s17 = sshll.u32 [#allocation2], 4
      %s18 = int_to_ptr.vmem [resolvable:$true] %s17
      %20 = dma.hbm_to_vmem [thread:$0]  %s0, 128, %s18, [#allocation3]
    $region5: #{_linear_pallas.1} parent=1 // pred_fallthru
      _
    // Predicated region
    $region6: #{_linear_pallas.1} parent=1 // pred_check
      _
    $region7: #{_linear_pallas.1} parent=1 // pred_check_branch
      %22 = sbr.rel (0) target = $region9
    $region8: #{_linear_pallas.1} parent=1 // pred_region
      %s24 = ssub.s32 512, 512
      %25 = vsyncadd [#allocation6], %s24
      %s26 = sshll.u32 [#allocation5], 4
      %s27 = int_to_ptr.vmem [resolvable:$true] %s26
      %32 = dma.hbm_to_vmem [thread:$0]  %s1, 512, %s27, [#allocation6], 128, 128, 8
    $region9: #{_linear_pallas.1} parent=1 // pred_fallthru
      _
    // Predicated region
    $region10: #{_linear_pallas.1} parent=1 // pred_check
      _
    $region11: #{_linear_pallas.1} parent=1 // pred_check_branch
      %34 = sbr.rel (0) target = $region13
    $region12: #{_linear_pallas.1} parent=1 // pred_region
      _
    $region13: #{_linear_pallas.1} parent=1 // pred_fallthru
      _
    // Predicated region
    $region14: #{_linear_pallas.1} parent=1 // pred_check
      _
    $region15: #{_linear_pallas.1} parent=1 // pred_check_branch
      %36 = sbr.rel (0) target = $region17
    $region16: #{_linear_pallas.1} parent=1 // pred_region
      %37 = dma.done [#allocation3], 128
    $region17: #{_linear_pallas.1} parent=1 // pred_fallthru
      _
    // Predicated region
    $region18: #{_linear_pallas.1} parent=1 // pred_check
      _
    $region19: #{_linear_pallas.1} parent=1 // pred_check_branch
      %39 = sbr.rel (0) target = $region21
    $region20: #{_linear_pallas.1} parent=1 // pred_region
      %40 = dma.done [#allocation6], 512
    $region21: #{_linear_pallas.1} parent=1 // pred_fallthru
      _
    %v41 = vld [vmem:[#allocation2] sm:$0xff]
    %v42 = vld [vmem:[#allocation5] sm:$0xff]
    %v43 = vld [vmem:[#allocation5 + $0x8] sm:$0xff]
    %v44 = vld [vmem:[#allocation5 + $0x10] sm:$0xff]
    %v45 = vld [vmem:[#allocation5 + $0x18] sm:$0xff]
    %v46 = vld [vmem:[%s2] sm:$0x1]
    %v48 = vlaneseq
    %v49 = vshrl.u32 %v48, 7
    %v50 = vsub.s32 0, %v49
    %v51 = vrot.slane %v46, %v50
    %vm53 = vcmask 261120
    %v55 = vsel %vm53, %v41, 0
    %57 = vmatprep.subr.mxu0 0.0
    %58 = vmatpush1.msra.mxu0 %v42
    %59 = vmatprep.subr.mxu0 0.0
    %60 = vmatpush1.msra.mxu0 %v43
    %61 = vmatprep.subr.mxu0 0.0
    %62 = vmatpush1.msra.mxu0 %v44
    %63 = vmatprep.subr.mxu0 0.0
    %64 = vmatpush1.msra.mxu0 %v45
    %65 = vmatprep.subr.mxu0 0.0
    %66 = vmatpush1.msra.mxu0 0.0
    %67 = vmatprep.subr.mxu0 0.0
    %68 = vmatpush1.msra.mxu0 0.0
    %69 = vmatprep.subr.mxu0 0.0
    %70 = vmatpush1.msra.mxu0 0.0
    %71 = vmatprep.subr.mxu0 0.0
    %72 = vmatpush1.msra.mxu0 0.0
    %73 = vmatprep.subr.mxu0 0.0
    %74 = vmatpush1.msra.mxu0 0.0
    %75 = vmatprep.subr.mxu0 0.0
    %76 = vmatpush1.msra.mxu0 0.0
    %77 = vmatprep.subr.mxu0 0.0
    %78 = vmatpush1.msra.mxu0 0.0
    %79 = vmatprep.subr.mxu0 0.0
    %80 = vmatpush1.msra.mxu0 0.0
    %81 = vmatprep.subr.mxu0 0.0
    %82 = vmatpush1.msra.mxu0 0.0
    %83 = vmatprep.subr.mxu0 0.0
    %84 = vmatpush1.msra.mxu0 0.0
    %85 = vmatprep.subr.mxu0 0.0
    %86 = vmatpush1.msra.mxu0 0.0
    %87 = vmatprep.subr.mxu0 0.0
    %88 = vmatpush1.msra.mxu0 0.0
    %89 = vmatprep.subr.mxu0 0.0
    %90 = vmatpush1.msra.mxu0 0.0
    %91 = vmatprep.subr.mxu0 0.0
    %92 = vmatpush1.msra.mxu0 0.0
    %93 = vmatprep.subr.mxu0 0.0
    %94 = vmatpush1.msra.mxu0 0.0
    %95 = vmatprep.subr.mxu0 0.0
    %96 = vmatpush1.msra.mxu0 0.0
    %97 = vmatprep.subr.mxu0 0.0
    %98 = vmatpush1.msra.mxu0 0.0
    %99 = vmatprep.subr.mxu0 0.0
    %100 = vmatpush1.msra.mxu0 0.0
    %101 = vmatprep.subr.mxu0 0.0
    %102 = vmatpush1.msra.mxu0 0.0
    %103 = vmatprep.subr.mxu0 0.0
    %104 = vmatpush1.msra.mxu0 0.0
    %105 = vmatprep.subr.mxu0 0.0
    %106 = vmatpush1.msra.mxu0 0.0
    %107 = vmatprep.subr.mxu0 0.0
    %108 = vmatpush1.msra.mxu0 0.0
    %109 = vmatprep.subr.mxu0 0.0
    %110 = vmatpush1.msra.mxu0 0.0
    %111 = vmatprep.subr.mxu0 0.0
    %112 = vmatpush1.msra.mxu0 0.0
    %113 = vmatprep.subr.mxu0 0.0
    %114 = vmatpush1.msra.mxu0 0.0
    %115 = vmatprep.subr.mxu0 0.0
    %116 = vmatpush1.msra.mxu0 0.0
    %117 = vmatprep.subr.mxu0 0.0
    %118 = vmatpush1.msra.mxu0 0.0
    %119 = vmatprep.subr.mxu0 0.0
    %120 = vmatpush1.msra.mxu0 0.0
    %121 = vmatprep.mubr.f32.mxu0 0.0
    %122 = vmatmul.mubr.f32.gmra.mrb[0].mxu0 %v55
    %v123 = vpop.f32.mrb[0].mxu0
    %v124 = vadd.f32 %v51, %v123
    %v125 = vpop.f32.mrb[0].mxu0
    %126 = vdwg.mxu0
    %127 = vst [vmem:[#allocation7] sm:$0xff] %v124
    // Predicated region
    $region22: #{_linear_pallas.1} parent=1 // pred_check
      _
    $region23: #{_linear_pallas.1} parent=1 // pred_check_branch
      %129 = sbr.rel (0) target = $region25
    $region24: #{_linear_pallas.1} parent=1 // pred_region
      %s131 = ssub.s32 128, 128
      %132 = vsyncadd [#allocation4], %s131
      %s134 = sshll.u32 [#allocation7], 4
      %s135 = int_to_ptr.vmem [resolvable:$true] %s134
      %137 = dma.vmem_to_hbm [thread:$0]  %s135, 128, %s3, [#allocation4]
    $region25: #{_linear_pallas.1} parent=1 // pred_fallthru
      _
    // Predicated region
    $region26: #{_linear_pallas.1} parent=1 // pred_check
      _
    $region27: #{_linear_pallas.1} parent=1 // pred_check_branch
      %139 = sbr.rel (0) target = $region29
    $region28: #{_linear_pallas.1} parent=1 // pred_region
      %140 = dma.done [#allocation4], 128
    $region29: #{_linear_pallas.1} parent=1 // pred_fallthru
      _
    %141 = vsyncpa [#allocation3], 1
    %142 = vsyncpa [#allocation6], 1
    %143 = vsyncpa [#allocation4], 1

</llo_original>
